<compile_context>
chip_gen: v5e
topology: v5e:2x2
jax: 0.10.0
libtpu: 0.0.40
codegen_flags: <defaults>
</compile_context>

<pallas_src>
import functools

import jax
import jax.numpy as jnp
from jax.experimental import pallas as pl
from jax.experimental.pallas import tpu as pltpu


def _actor_kernel(x_ref, w1_ref, w2_ref, w3_ref, c_ref, o_ref, *, hidden, n_actions):
    # Packed constants: row 0 = b1, row 1 = b2, row 2 = b3, row 3 = bound*0.5
    c = c_ref[...]                      # [4, max(hidden, n_actions)] f32
    b1 = c[0:1, :hidden]
    b2 = c[1:2, :hidden]
    b3 = c[2:3, :n_actions]
    bound_half = c[3:4, :n_actions]

    x = x_ref[...]

    # Layer 1: relu(x @ W1 + b1)   (f32 MXU matmul, f32 accumulate, VPU relu)
    h1 = jnp.dot(x, w1_ref[...], preferred_element_type=jnp.float32)
    h1 = jnp.maximum(h1 + b1, 0.0)

    # Layer 2: relu(h1 @ W2 + b2)
    h2 = jnp.dot(h1, w2_ref[...], preferred_element_type=jnp.float32)
    h2 = jnp.maximum(h2 + b2, 0.0)

    # Layer 3: tanh(h2 @ W3 + b3) * (action_high_bound * 0.5)   (tanh -> EUP)
    a = jnp.dot(h2, w3_ref[...], preferred_element_type=jnp.float32)
    a = jnp.tanh(a + b3)
    o_ref[...] = (a * bound_half).astype(o_ref.dtype)


def actor_forward(x, w1, b1, w2, b2, w3, b3, bound_half, *, batch_tile=4096):
    """Fused DDPG-actor forward.

    `bound_half` must be action_high_bound * 0.5 (folded once at init).
    Weights are [in_features, out_features]; biases / bound are [1, out].
    """
    B, n_states = x.shape
    hidden = w1.shape[1]
    n_actions = w3.shape[1]

    # Everything stays f32 (no bf16 casts anywhere).
    x = x.astype(jnp.float32)
    w1 = w1.astype(jnp.float32)
    w2 = w2.astype(jnp.float32)
    w3 = w3.astype(jnp.float32)

    # Pack the four tiny per-feature constants into one [4, cw] operand.
    cw = max(hidden, n_actions)

    def _row(v):
        v = jnp.asarray(v, jnp.float32).reshape(1, -1)
        return jnp.pad(v, ((0, 0), (0, cw - v.shape[1])))

    consts = jnp.concatenate(
        [_row(b1), _row(b2), _row(b3), _row(bound_half)], axis=0)  # [4, cw]

    kernel = functools.partial(_actor_kernel, hidden=hidden, n_actions=n_actions)

    if B <= batch_tile:
        # Small/medium batch: single invocation, no grid -> no pipeline
        # machinery, every operand is one full-array VMEM block.
        vmem = pl.BlockSpec(memory_space=pltpu.MemorySpace.VMEM)
        return pl.pallas_call(
            kernel,
            out_shape=jax.ShapeDtypeStruct((B, n_actions), jnp.float32),
            in_specs=[vmem] * 5,
            out_specs=vmem,
        )(x, w1, w2, w3, consts)

    # Large batch: tile the batch axis.  Ragged last block is handled by
    # Pallas boundary masking (no jnp.pad / slice round-trips over HBM).
    tb = max(8, (batch_tile // 8) * 8)  # sublane-aligned tile
    grid = (pl.cdiv(B, tb),)

    resident = lambda arr: pl.BlockSpec(arr.shape, lambda i: (0, 0))

    return pl.pallas_call(
        kernel,
        out_shape=jax.ShapeDtypeStruct((B, n_actions), jnp.float32),
        grid=grid,
        in_specs=[
            pl.BlockSpec((tb, n_states), lambda i: (i, 0)),   # x: per-step tile
            resident(w1), resident(w2), resident(w3),          # VMEM-resident
            resident(consts),
        ],
        out_specs=pl.BlockSpec((tb, n_actions), lambda i: (i, 0)),
        compiler_params=pltpu.CompilerParams(
            dimension_semantics=("parallel",)),
    )(x, w1, w2, w3, consts)


def init_params(key, n_states, hidden, n_actions):
    """Deterministic synthetic init (shapes follow the PyTorch module)."""
    ks = jax.random.split(key, 6)
    w1 = jax.random.normal(ks[0], (n_states, hidden), jnp.float32) * 0.1
    b1 = jax.random.normal(ks[1], (1, hidden), jnp.float32) * 0.1
    w2 = jax.random.normal(ks[2], (hidden, hidden), jnp.float32) * 0.1
    b2 = jax.random.normal(ks[3], (1, hidden), jnp.float32) * 0.1
    w3 = jax.random.normal(ks[4], (hidden, n_actions), jnp.float32) * 0.1
    b3 = jax.random.normal(ks[5], (1, n_actions), jnp.float32) * 0.1
    return w1, b1, w2, b2, w3, b3


def actor_ref(x, w1, b1, w2, b2, w3, b3, bound):
    h1 = jax.nn.relu(x @ w1 + b1)
    h2 = jax.nn.relu(h1 @ w2 + b2)
    return jnp.tanh(h2 @ w3 + b3) * bound * 0.5


if __name__ == "__main__":
    # cfg: n_states=16, actor_hidden_dim=32, n_actions=8
    n_states, hidden, n_actions = 16, 32, 8

    key = jax.random.PRNGKey(0)
    kx, kp, kb, kx2 = jax.random.split(key, 4)

    w1, b1, w2, b2, w3, b3 = init_params(kp, n_states, hidden, n_actions)
    # cfg.action_high_bound: per-action upper bound (deterministic, positive)
    bound = jax.random.uniform(kb, (1, n_actions), jnp.float32) + 0.5
    bound_half = bound * 0.5  # one-time init-side fold of the 0.5 constant

    # --- small batch: gridless path, full-VMEM blocks ---
    B = 8
    x = jax.random.normal(kx, (B, n_states), jnp.float32)
    out = actor_forward(x, w1, b1, w2, b2, w3, b3, bound_half)
    out = jax.block_until_ready(out)
    ref = actor_ref(x, w1, b1, w2, b2, w3, b3, bound)
    assert out.shape == (B, n_actions)
    assert jnp.allclose(out, ref, atol=2e-2, rtol=2e-2), "mismatch (small batch)"

    # --- medium batch: still gridless under the raised default tile ---
    B2 = 300
    x2 = jax.random.normal(kx2, (B2, n_states), jnp.float32)
    out2 = actor_forward(x2, w1, b1, w2, b2, w3, b3, bound_half)
    out2 = jax.block_until_ready(out2)
    ref2 = actor_ref(x2, w1, b1, w2, b2, w3, b3, bound)
    assert out2.shape == (B2, n_actions)
    assert jnp.allclose(out2, ref2, atol=2e-2, rtol=2e-2), "mismatch (gridless)"

    # --- grid path with a ragged last block (exercises boundary masking) ---
    out3 = actor_forward(x2, w1, b1, w2, b2, w3, b3, bound_half, batch_tile=128)
    out3 = jax.block_until_ready(out3)
    assert out3.shape == (B2, n_actions)
    assert jnp.allclose(out3, ref2, atol=2e-2, rtol=2e-2), "mismatch (grid path)"

    print("KERNEL_OK")
</pallas_src>

<mosaic_0001>
module attributes {stable_mosaic.version = 11 : i64} {
  func.func @_actor_kernel(%arg0: memref<8x16xf32, #tpu.memory_space<vmem>>, %arg1: memref<16x32xf32, #tpu.memory_space<vmem>>, %arg2: memref<32x32xf32, #tpu.memory_space<vmem>>, %arg3: memref<32x8xf32, #tpu.memory_space<vmem>>, %arg4: memref<4x32xf32, #tpu.memory_space<vmem>>, %arg5: memref<8x8xf32, #tpu.memory_space<vmem>>) attributes {dimension_semantics = [], scalar_prefetch = 0 : i64, scratch_operands = 0 : i64, tpu.core_type = #tpu.core_type<tc>} {
    %c0 = arith.constant 0 : index
    %c0_0 = arith.constant 0 : index
    %0 = vector.load %arg4[%c0, %c0_0] : memref<4x32xf32, #tpu.memory_space<vmem>>, vector<4x32xf32>
    %1 = vector.extract_strided_slice %0 {offsets = [0, 0], sizes = [1, 32], strides = [1, 1]} : vector<4x32xf32> to vector<1x32xf32>
    %2 = vector.extract_strided_slice %0 {offsets = [1, 0], sizes = [1, 32], strides = [1, 1]} : vector<4x32xf32> to vector<1x32xf32>
    %3 = vector.extract_strided_slice %0 {offsets = [2, 0], sizes = [1, 8], strides = [1, 1]} : vector<4x32xf32> to vector<1x8xf32>
    %4 = vector.extract_strided_slice %0 {offsets = [3, 0], sizes = [1, 8], strides = [1, 1]} : vector<4x32xf32> to vector<1x8xf32>
    %c0_1 = arith.constant 0 : index
    %c0_2 = arith.constant 0 : index
    %5 = vector.load %arg0[%c0_1, %c0_2] : memref<8x16xf32, #tpu.memory_space<vmem>>, vector<8x16xf32>
    %c0_3 = arith.constant 0 : index
    %c0_4 = arith.constant 0 : index
    %6 = vector.load %arg1[%c0_3, %c0_4] : memref<16x32xf32, #tpu.memory_space<vmem>>, vector<16x32xf32>
    %cst = arith.constant dense<0.000000e+00> : vector<8x32xf32>
    %7 = tpu.matmul %5, %6, %cst {dimension_numbers = #tpu.dot_dimension_numbers<[1], [0], [0], [1], [0, 0, 1, 1], [], []>} : vector<8x16xf32>, vector<16x32xf32>, vector<8x32xf32> -> vector<8x32xf32>
    %8 = vector.broadcast %1 : vector<1x32xf32> to vector<8x32xf32>
    %9 = arith.addf %7, %8 : vector<8x32xf32>
    %cst_5 = arith.constant 0.000000e+00 : f32
    %10 = vector.broadcast %cst_5 : f32 to vector<8x32xf32>
    %11 = arith.maximumf %9, %10 : vector<8x32xf32>
    %c0_6 = arith.constant 0 : index
    %c0_7 = arith.constant 0 : index
    %12 = vector.load %arg2[%c0_6, %c0_7] : memref<32x32xf32, #tpu.memory_space<vmem>>, vector<32x32xf32>
    %cst_8 = arith.constant dense<0.000000e+00> : vector<8x32xf32>
    %13 = tpu.matmul %11, %12, %cst_8 {dimension_numbers = #tpu.dot_dimension_numbers<[1], [0], [0], [1], [0, 0, 1, 1], [], []>} : vector<8x32xf32>, vector<32x32xf32>, vector<8x32xf32> -> vector<8x32xf32>
    %14 = vector.broadcast %2 : vector<1x32xf32> to vector<8x32xf32>
    %15 = arith.addf %13, %14 : vector<8x32xf32>
    %cst_9 = arith.constant 0.000000e+00 : f32
    %16 = vector.broadcast %cst_9 : f32 to vector<8x32xf32>
    %17 = arith.maximumf %15, %16 : vector<8x32xf32>
    %c0_10 = arith.constant 0 : index
    %c0_11 = arith.constant 0 : index
    %18 = vector.load %arg3[%c0_10, %c0_11] : memref<32x8xf32, #tpu.memory_space<vmem>>, vector<32x8xf32>
    %cst_12 = arith.constant dense<0.000000e+00> : vector<8x8xf32>
    %19 = tpu.matmul %17, %18, %cst_12 {dimension_numbers = #tpu.dot_dimension_numbers<[1], [0], [0], [1], [0, 0, 1, 1], [], []>} : vector<8x32xf32>, vector<32x8xf32>, vector<8x8xf32> -> vector<8x8xf32>
    %20 = vector.broadcast %3 : vector<1x8xf32> to vector<8x8xf32>
    %21 = arith.addf %19, %20 : vector<8x8xf32>
    %22 = math.tanh %21 : vector<8x8xf32>
    %23 = vector.broadcast %4 : vector<1x8xf32> to vector<8x8xf32>
    %24 = arith.mulf %22, %23 : vector<8x8xf32>
    %c0_13 = arith.constant 0 : index
    %c0_14 = arith.constant 0 : index
    %25 = vector.load %arg5[%c0_13, %c0_14] : memref<8x8xf32, #tpu.memory_space<vmem>>, vector<8x8xf32>
    tpu.vector_store %arg5[%c0_13, %c0_14], %24 {strides = array<i32>} : memref<8x8xf32, #tpu.memory_space<vmem>>, vector<8x8xf32>,
    return
  }
}

</mosaic_0001>

<llo_original>
// kernel: tpu_custom_call.1
$region0: #{tpu_custom_call.1}
  #allocation0 [shape = 'u32[]', space=smem, size = 0x4, offset = 0x4, fixed_abs, tag = 'smem constant byte address 0x4 - core index']
  #allocation1 [shape = 'u32[72,128]{1,0:T(1,128)}', space=vmem, size = 0x9000, scoped, tag = 'internal scratch']
  %s0 = inlined_call_operand.vmem [shape: f32[8,16], index: 0, kind: input, shape index: {}]
  %s1 = inlined_call_operand.hbm [shape: f32[16,32], index: 1, kind: input, shape index: {}]
  %s2 = inlined_call_operand.vmem [shape: f32[32,32], index: 2, kind: input, shape index: {}]
  %s3 = inlined_call_operand.vmem [shape: f32[32,8], index: 3, kind: input, shape index: {}]
  %s4 = inlined_call_operand.hbm [shape: f32[4,32], index: 4, kind: input, shape index: {}]
  %s5 = inlined_call_operand.hbm [shape: f32[8,8], index: 5, kind: output, shape index: {}]
  %s6 = sld [smem:[#allocation0]]
  $region38: #{tpu_custom_call.1} parent=0
    _
  %s8 = ssub.s32 1, %s6
  %s9 = scalar_select 0, %s8, %s6
  $region1: #{tpu_custom_call.1} parent=0
    #allocation2 [shape = 'u8[8192]{0}', space=vmem, size = 0x2000, scoped, tag = 'input window, operand 1, single buffered']
    #allocation3 [shape = 's32[1]{0}', space=sflag, size = 0x4, scoped, tag = 'scoped memory for tpu_custom_call.1']
    #allocation4 [shape = 's32[1]{0}', space=sflag, size = 0x4, scoped, tag = 'scoped memory for tpu_custom_call.1']
    #allocation5 [shape = 'u8[2048]{0}', space=vmem, size = 0x800, scoped, tag = 'input window, operand 4, single buffered']
    #allocation6 [shape = 's32[1]{0}', space=sflag, size = 0x4, scoped, tag = 'scoped memory for tpu_custom_call.1']
    #allocation7 [shape = 'u8[4096]{0}', space=vmem, size = 0x1000, scoped, tag = 'output window, operand 0, single buffered']
    %10 = vsyncpa [#allocation3], 0
    %11 = vsyncpa [#allocation6], 0
    %12 = vsyncpa [#allocation4], 0
    // Predicated region
    $region2: #{tpu_custom_call.1} parent=1 // pred_check
      _
    $region3: #{tpu_custom_call.1} parent=1 // pred_check_branch
      %14 = sbr.rel (0) target = $region5
    $region4: #{tpu_custom_call.1} parent=1 // pred_region
      _
    $region5: #{tpu_custom_call.1} parent=1 // pred_fallthru
      _
    // Predicated region
    $region6: #{tpu_custom_call.1} parent=1 // pred_check
      _
    $region7: #{tpu_custom_call.1} parent=1 // pred_check_branch
      %16 = sbr.rel (0) target = $region9
    $region8: #{tpu_custom_call.1} parent=1 // pred_region
      %18 = vsyncadd [#allocation3], 0
      %s19 = sshll.u32 %s1, 4
      %s20 = int_to_ptr.hbm [resolvable:$true] %s19
      %s21 = sshll.u32 [#allocation2], 4
      %s22 = int_to_ptr.vmem [resolvable:$true] %s21
      %27 = dma.hbm_to_vmem [thread:$0]  %s20, 256, %s22, [#allocation3], 128, 128, 8
    $region9: #{tpu_custom_call.1} parent=1 // pred_fallthru
      _
    // Predicated region
    $region10: #{tpu_custom_call.1} parent=1 // pred_check
      _
    $region11: #{tpu_custom_call.1} parent=1 // pred_check_branch
      %29 = sbr.rel (0) target = $region13
    $region12: #{tpu_custom_call.1} parent=1 // pred_region
      _
    $region13: #{tpu_custom_call.1} parent=1 // pred_fallthru
      _
    // Predicated region
    $region14: #{tpu_custom_call.1} parent=1 // pred_check
      _
    $region15: #{tpu_custom_call.1} parent=1 // pred_check_branch
      %31 = sbr.rel (0) target = $region17
    $region16: #{tpu_custom_call.1} parent=1 // pred_region
      _
    $region17: #{tpu_custom_call.1} parent=1 // pred_fallthru
      _
    // Predicated region
    $region18: #{tpu_custom_call.1} parent=1 // pred_check
      _
    $region19: #{tpu_custom_call.1} parent=1 // pred_check_branch
      %33 = sbr.rel (0) target = $region21
    $region20: #{tpu_custom_call.1} parent=1 // pred_region
      %35 = vsyncadd [#allocation6], 0
      %s37 = sshll.u32 %s4, 4
      %s38 = int_to_ptr.hbm [resolvable:$true] %s37
      %s39 = sshll.u32 [#allocation5], 4
      %s40 = int_to_ptr.vmem [resolvable:$true] %s39
      %42 = dma.hbm_to_vmem [thread:$0]  %s38, 64, %s40, [#allocation6]
    $region21: #{tpu_custom_call.1} parent=1 // pred_fallthru
      _
    // Predicated region
    $region22: #{tpu_custom_call.1} parent=1 // pred_check
      _
    $region23: #{tpu_custom_call.1} parent=1 // pred_check_branch
      %44 = sbr.rel (0) target = $region25
    $region24: #{tpu_custom_call.1} parent=1 // pred_region
      %46 = dma.done [#allocation3], 256
    $region25: #{tpu_custom_call.1} parent=1 // pred_fallthru
      _
    // Predicated region
    $region26: #{tpu_custom_call.1} parent=1 // pred_check
      _
    $region27: #{tpu_custom_call.1} parent=1 // pred_check_branch
      %48 = sbr.rel (0) target = $region29
    $region28: #{tpu_custom_call.1} parent=1 // pred_region
      %50 = dma.done [#allocation6], 64
    $region29: #{tpu_custom_call.1} parent=1 // pred_fallthru
      _
    %v51 = vld [vmem:[#allocation5] sm:$0xf]
    %v52 = vld [vmem:[%s0] sm:$0xff]
    %v53 = vld [vmem:[#allocation2] sm:$0xff]
    %v54 = vld [vmem:[#allocation2 + $0x8] sm:$0xff]
    %v55 = vperm.slane %v51, 0
    %vm56 = vcmask 130048
    %v58 = vsel %vm56, %v52, 0
    %60 = vmatpush.msra.mxu0 0.0
    %61 = vmatpush.msra.mxu0 0.0
    %62 = vmatpush.msra.mxu0 0.0
    %63 = vmatpush.msra.mxu0 0.0
    %64 = vmatpush.msra.mxu0 0.0
    %65 = vmatpush.msra.mxu0 0.0
    %66 = vmatpush.msra.mxu0 0.0
    %67 = vmatpush.msra.mxu0 0.0
    %68 = vmatpush.msra.mxu0 0.0
    %69 = vmatpush.msra.mxu0 0.0
    %70 = vmatpush.msra.mxu0 0.0
    %71 = vmatpush.msra.mxu0 0.0
    %72 = vmatpush.msra.mxu0 0.0
    %73 = vmatpush.msra.mxu0 0.0
    %74 = vmatpush.msra.mxu0 %v54
    %75 = vmatpush.msra.mxu0 %v53
    %76 = vmatmul.f32.gmra.mxu0 %v58
    %v77 = vpop.f32.mrf.mxu0
    %v78 = vadd.f32 %v55, %v77
    %79 = vdwg.mxu0
    %v80 = vmax.f32 %v78, 0.0
    %v81 = vld [vmem:[%s2] sm:$0xff]
    %v82 = vld [vmem:[%s2 + $0x8] sm:$0xff]
    %v83 = vld [vmem:[%s2 + $0x10] sm:$0xff]
    %v84 = vld [vmem:[%s2 + $0x18] sm:$0xff]
    %v85 = vperm.slane %v51, 1
    %vm86 = vcmask 261120
    %v88 = vsel %vm86, %v80, 0
    %90 = vmatpush.msra.mxu0 0.0
    %91 = vmatpush.msra.mxu0 0.0
    %92 = vmatpush.msra.mxu0 0.0
    %93 = vmatpush.msra.mxu0 0.0
    %94 = vmatpush.msra.mxu0 0.0
    %95 = vmatpush.msra.mxu0 0.0
    %96 = vmatpush.msra.mxu0 0.0
    %97 = vmatpush.msra.mxu0 0.0
    %98 = vmatpush.msra.mxu0 0.0
    %99 = vmatpush.msra.mxu0 0.0
    %100 = vmatpush.msra.mxu0 0.0
    %101 = vmatpush.msra.mxu0 0.0
    %102 = vmatpush.msra.mxu0 %v84
    %103 = vmatpush.msra.mxu0 %v83
    %104 = vmatpush.msra.mxu0 %v82
    %105 = vmatpush.msra.mxu0 %v81
    %106 = vmatmul.f32.gmra.mxu0 %v88
    %v107 = vpop.f32.mrf.mxu0
    %v108 = vadd.f32 %v85, %v107
    %109 = vdwg.mxu0
    %v110 = vmax.f32 %v108, 0.0
    %v111 = vld [vmem:[%s3] sm:$0xff]
    %v112 = vld [vmem:[%s3 + $0x8] sm:$0xff]
    %v113 = vld [vmem:[%s3 + $0x10] sm:$0xff]
    %v114 = vld [vmem:[%s3 + $0x18] sm:$0xff]
    %v115 = vperm.slane %v51, 2
    %v117 = vsel %vm86, %v110, 0
    %119 = vmatpush.msra.mxu0 0.0
    %120 = vmatpush.msra.mxu0 0.0
    %121 = vmatpush.msra.mxu0 0.0
    %122 = vmatpush.msra.mxu0 0.0
    %123 = vmatpush.msra.mxu0 0.0
    %124 = vmatpush.msra.mxu0 0.0
    %125 = vmatpush.msra.mxu0 0.0
    %126 = vmatpush.msra.mxu0 0.0
    %127 = vmatpush.msra.mxu0 0.0
    %128 = vmatpush.msra.mxu0 0.0
    %129 = vmatpush.msra.mxu0 0.0
    %130 = vmatpush.msra.mxu0 0.0
    %131 = vmatpush.msra.mxu0 %v114
    %132 = vmatpush.msra.mxu0 %v113
    %133 = vmatpush.msra.mxu0 %v112
    %134 = vmatpush.msra.mxu0 %v111
    %135 = vmatmul.f32.gmra.mxu0 %v117
    %v136 = vpop.f32.mrf.mxu0
    %v137 = vadd.f32 %v115, %v136
    %138 = vdwg.mxu0
    %v139 = vtanh.pop %v137
    %v140 = vperm.slane %v51, 3
    %v141 = vmul.f32 %v139, %v140
    %vm142 = vcmask 64512
    %143 = vst.msk [vmem:[#allocation7] sm:$0xff] %vm142, %v141
    // Predicated region
    $region30: #{tpu_custom_call.1} parent=1 // pred_check
      _
    $region31: #{tpu_custom_call.1} parent=1 // pred_check_branch
      %145 = sbr.rel (0) target = $region33
    $region32: #{tpu_custom_call.1} parent=1 // pred_region
      %147 = vsyncadd [#allocation4], 0
      %s149 = sshll.u32 [#allocation7], 4
      %s150 = int_to_ptr.vmem [resolvable:$true] %s149
      %s151 = sshll.u32 %s5, 4
      %s152 = int_to_ptr.hbm [resolvable:$true] %s151
      %154 = dma.vmem_to_hbm [thread:$0]  %s150, 128, %s152, [#allocation4]
    $region33: #{tpu_custom_call.1} parent=1 // pred_fallthru
      _
    // Predicated region
    $region34: #{tpu_custom_call.1} parent=1 // pred_check
      _
    $region35: #{tpu_custom_call.1} parent=1 // pred_check_branch
      %156 = sbr.rel (0) target = $region37
    $region36: #{tpu_custom_call.1} parent=1 // pred_region
      %158 = dma.done [#allocation4], 128
    $region37: #{tpu_custom_call.1} parent=1 // pred_fallthru
      _
    %159 = vsyncpa [#allocation3], 1
    %160 = vsyncpa [#allocation6], 1
    %161 = vsyncpa [#allocation4], 1

</llo_original>
